<compile_context>
chip_gen: v5e
topology: v5e:2x2
jax: 0.10.0
libtpu: 0.0.40
codegen_flags: <defaults>
</compile_context>

<pallas_src>
import functools

import jax
import jax.numpy as jnp
from jax.experimental import pallas as pl
from jax.experimental.pallas import tpu as pltpu


# ---------------------------------------------------------------------------
# Kernel
# ---------------------------------------------------------------------------
def _bit_estimator_kernel(x_ref, p_ref, o_ref, *, bf16_eup):
    """x_ref: (r_tile, hw_tile) f32 activations.
       p_ref: (r_tile, 11) pre-activated per-row params in column order
              [sp(h1), b1, th(a1), sp(h2), b2, th(a2), sp(h3), b3, th(a3), sp(h4), b4]."""
    x = x_ref[...]
    p = p_ref[...]

    def col(k):                      # (r_tile, 1) -> broadcasts along lanes
        return p[:, k:k + 1]

    def tanh(y):
        if bf16_eup:                 # bf16 EUP ~2x transcendental throughput (v6e/v7x)
            return jnp.tanh(y.astype(jnp.bfloat16)).astype(jnp.float32)
        return jnp.tanh(y)

    # f1, f2, f3:  y = x * softplus(h) + b ;  x = y + tanh(y) * tanh(a)
    for k in range(3):
        y = x * col(3 * k) + col(3 * k + 1)
        x = y + tanh(y) * col(3 * k + 2)

    # f4 (final):  sigmoid(x * softplus(h) + b)
    y = x * col(9) + col(10)
    if bf16_eup:
        out = jax.nn.sigmoid(y.astype(jnp.bfloat16)).astype(jnp.float32)
    else:
        out = jax.nn.sigmoid(y)
    o_ref[...] = out.astype(o_ref.dtype)


# ---------------------------------------------------------------------------
# Per-generation configuration
# ---------------------------------------------------------------------------
def _chip_generation():
    try:
        kind = jax.devices()[0].device_kind.lower()
    except Exception:
        return "unknown"
    if "v5 lite" in kind or "v5e" in kind or "v5lite" in kind:
        return "v5e"
    if "v6" in kind:
        return "v6e"
    if "v7" in kind or "7x" in kind:
        return "v7x"
    return "unknown"


# (row_tile_target, lane_tile_target, vmem_limit_bytes, two_tensorcores)
_TILE_CONFIG = {
    "v5e":     (512, 2048, 64 * 1024 * 1024, False),  # 4 MiB blocks, raised scoped VMEM
    "v6e":     (512, 2048, 64 * 1024 * 1024, False),
    "v7x":     (256, 2048, None,             True),   # 2 MiB blocks fit 64 MiB VMEM defaults
    "unknown": (256, 2048, None,             False),
}


def _round_up(n, m):
    return ((n + m - 1) // m) * m


# ---------------------------------------------------------------------------
# Wrapper
# ---------------------------------------------------------------------------
def bit_estimator_forward(x_nchw, params, *, bf16_eup=None,
                          row_tile_target=None, lane_tile_target=None,
                          out_dtype=jnp.float32):
    """x_nchw: (B, C, H, W) float32.  params: dict of per-channel (C,) arrays."""
    B, C, H, W = x_nchw.shape
    rows, cols = B * C, H * W

    gen = _chip_generation()
    cfg_rt, cfg_lt, vmem_limit, two_cores = _TILE_CONFIG[gen]
    if row_tile_target is None:
        row_tile_target = cfg_rt
    if lane_tile_target is None:
        lane_tile_target = cfg_lt
    if bf16_eup is None:
        bf16_eup = gen in ("v6e", "v7x")   # never on v5e (no bf16 EUP/VPU)

    # Free reshape (no transpose, no HBM copy): NCHW is (batch*channel)-major
    # over contiguous H*W.
    x2d = x_nchw.reshape(rows, cols).astype(jnp.float32)

    # Tile selection: each block dim is either a multiple of (8, 128) or the
    # full array dim; ragged edges are handled by the cdiv grid (masked blocks).
    r_tile = rows if rows <= row_tile_target else row_tile_target
    hw_tile = cols if cols <= lane_tile_target else lane_tile_target

    # v7x megacore: make sure there are >=2 grid steps so both TCs get work.
    if two_cores and pl.cdiv(rows, r_tile) * pl.cdiv(cols, hw_tile) < 2:
        if rows >= 16:
            r_tile = _round_up(pl.cdiv(rows, 2), 8)
        elif cols >= 256:
            hw_tile = _round_up(pl.cdiv(cols, 2), 128)

    grid = (pl.cdiv(rows, r_tile), pl.cdiv(cols, hw_tile))

    # Pre-activate the per-channel params once (tiny) and lay them out as
    # (B*C, 11): row r = b*C + c picks up channel c's params.  Lane padding is
    # a single 11->128, not one 1->128 per parameter plane.
    sp = jax.nn.softplus
    p_stack = jnp.stack([
        sp(params["h1"]), params["b1"], jnp.tanh(params["a1"]),
        sp(params["h2"]), params["b2"], jnp.tanh(params["a2"]),
        sp(params["h3"]), params["b3"], jnp.tanh(params["a3"]),
        sp(params["h4"]), params["b4"],
    ], axis=1).astype(jnp.float32)                    # (C, 11)
    p_rows = jnp.tile(p_stack, (B, 1))                # (B*C, 11)

    x_spec = pl.BlockSpec((r_tile, hw_tile), lambda ri, ci: (ri, ci))
    # Param block index is constant across ci (innermost axis) -> DMA is reused
    # for the whole lane sweep of a row block.
    p_spec = pl.BlockSpec((r_tile, 11), lambda ri, ci: (ri, 0))

    n_elem = rows * cols
    cost = pl.CostEstimate(flops=14 * n_elem,
                           transcendentals=4 * n_elem,
                           bytes_accessed=8 * n_elem + 44 * rows)

    out2d = pl.pallas_call(
        functools.partial(_bit_estimator_kernel, bf16_eup=bf16_eup),
        out_shape=jax.ShapeDtypeStruct((rows, cols), out_dtype),
        grid_spec=pltpu.PrefetchScalarGridSpec(
            num_scalar_prefetch=0,
            grid=grid,
            in_specs=[x_spec, p_spec],
            out_specs=x_spec,
        ),
        compiler_params=pltpu.CompilerParams(
            dimension_semantics=("parallel", "parallel"),
            vmem_limit_bytes=vmem_limit),
        cost_estimate=cost,
    )(x2d, p_rows)

    return out2d.reshape(B, C, H, W)   # free reshape back to NCHW


# ---------------------------------------------------------------------------
# Params / reference
# ---------------------------------------------------------------------------
def init_params(key, channel):
    """Deterministic init matching nn.init.normal_(..., 0, 0.01); shapes (C,)."""
    names = ["h1", "b1", "a1", "h2", "b2", "a2", "h3", "b3", "a3", "h4", "b4"]
    keys = jax.random.split(key, len(names))
    return {n: 0.01 * jax.random.normal(k, (channel,), dtype=jnp.float32)
            for n, k in zip(names, keys)}


def _reference(x_nchw, params):
    """Pure-JAX reference (same math as the PyTorch module, NCHW broadcast)."""
    C = x_nchw.shape[1]
    pc = lambda v: v.reshape(1, C, 1, 1)
    x = x_nchw
    for i in ("1", "2", "3"):
        y = x * jax.nn.softplus(pc(params["h" + i])) + pc(params["b" + i])
        x = y + jnp.tanh(y) * jnp.tanh(pc(params["a" + i]))
    y = x * jax.nn.softplus(pc(params["h4"])) + pc(params["b4"])
    return jax.nn.sigmoid(y)


# ---------------------------------------------------------------------------
# Test
# ---------------------------------------------------------------------------
if __name__ == "__main__":
    key = jax.random.PRNGKey(0)
    kx, kp, kx2 = jax.random.split(key, 3)

    # Primary shape implied by the module.
    B, C, H, W = 2, 4, 16, 16
    x = jax.random.normal(kx, (B, C, H, W), dtype=jnp.float32)
    params = init_params(kp, C)
    ref = _reference(x, params)

    # f32 transcendental path: tight check against the reference.
    out_f32 = jax.block_until_ready(bit_estimator_forward(x, params, bf16_eup=False))
    assert out_f32.shape == (B, C, H, W)
    assert jnp.allclose(out_f32, ref, atol=1e-5, rtol=1e-5)

    # Default (auto) path — bf16 EUP on v6e/v7x — checked at a looser tolerance.
    out_auto = jax.block_until_ready(bit_estimator_forward(x, params))
    assert jnp.allclose(out_auto, ref, atol=1e-2, rtol=1e-2)

    # Ragged shape exercising cdiv edge blocks in both grid axes (f32 path).
    B2, C2, H2, W2 = 3, 3, 12, 12          # rows=9, cols=144
    x2 = jax.random.normal(kx2, (B2, C2, H2, W2), dtype=jnp.float32)
    params2 = init_params(kp, C2)
    out2 = jax.block_until_ready(
        bit_estimator_forward(x2, params2, bf16_eup=False,
                              row_tile_target=8, lane_tile_target=128))
    assert jnp.allclose(out2, _reference(x2, params2), atol=1e-5, rtol=1e-5)

    print("KERNEL_OK")
</pallas_src>

<mosaic_0001>
module attributes {stable_mosaic.version = 11 : i64} {
  func.func @_bit_estimator_kernel(%arg0: i32, %arg1: i32, %arg2: memref<8x256xf32, #tpu.memory_space<vmem>>, %arg3: memref<8x11xf32, #tpu.memory_space<vmem>>, %arg4: memref<8x256xf32, #tpu.memory_space<vmem>>) attributes {dimension_semantics = [#tpu.dimension_semantics<parallel>, #tpu.dimension_semantics<parallel>], iteration_bounds = array<i64: 1, 1>, scalar_prefetch = 0 : i64, scratch_operands = 0 : i64, tpu.core_type = #tpu.core_type<tc>, window_params = [{transform_indices = @transform_0, window_bounds = array<i64: 8, 256>}, {transform_indices = @transform_1, window_bounds = array<i64: 8, 11>}, {transform_indices = @transform_2, window_bounds = array<i64: 8, 256>}]} {
    %c0 = arith.constant 0 : index
    %c0_0 = arith.constant 0 : index
    %0 = vector.load %arg2[%c0, %c0_0] : memref<8x256xf32, #tpu.memory_space<vmem>>, vector<8x256xf32>
    %c0_1 = arith.constant 0 : index
    %c0_2 = arith.constant 0 : index
    %1 = vector.load %arg3[%c0_1, %c0_2] : memref<8x11xf32, #tpu.memory_space<vmem>>, vector<8x11xf32>
    %2 = vector.extract_strided_slice %1 {offsets = [0, 0], sizes = [8, 1], strides = [1, 1]} : vector<8x11xf32> to vector<8x1xf32>
    %3 = vector.broadcast %2 : vector<8x1xf32> to vector<8x256xf32>
    %4 = arith.mulf %0, %3 : vector<8x256xf32>
    %5 = vector.extract_strided_slice %1 {offsets = [0, 1], sizes = [8, 1], strides = [1, 1]} : vector<8x11xf32> to vector<8x1xf32>
    %6 = vector.broadcast %5 : vector<8x1xf32> to vector<8x256xf32>
    %7 = arith.addf %4, %6 : vector<8x256xf32>
    %8 = math.tanh %7 : vector<8x256xf32>
    %9 = vector.extract_strided_slice %1 {offsets = [0, 2], sizes = [8, 1], strides = [1, 1]} : vector<8x11xf32> to vector<8x1xf32>
    %10 = vector.broadcast %9 : vector<8x1xf32> to vector<8x256xf32>
    %11 = arith.mulf %8, %10 : vector<8x256xf32>
    %12 = arith.addf %7, %11 : vector<8x256xf32>
    %13 = vector.extract_strided_slice %1 {offsets = [0, 3], sizes = [8, 1], strides = [1, 1]} : vector<8x11xf32> to vector<8x1xf32>
    %14 = vector.broadcast %13 : vector<8x1xf32> to vector<8x256xf32>
    %15 = arith.mulf %12, %14 : vector<8x256xf32>
    %16 = vector.extract_strided_slice %1 {offsets = [0, 4], sizes = [8, 1], strides = [1, 1]} : vector<8x11xf32> to vector<8x1xf32>
    %17 = vector.broadcast %16 : vector<8x1xf32> to vector<8x256xf32>
    %18 = arith.addf %15, %17 : vector<8x256xf32>
    %19 = math.tanh %18 : vector<8x256xf32>
    %20 = vector.extract_strided_slice %1 {offsets = [0, 5], sizes = [8, 1], strides = [1, 1]} : vector<8x11xf32> to vector<8x1xf32>
    %21 = vector.broadcast %20 : vector<8x1xf32> to vector<8x256xf32>
    %22 = arith.mulf %19, %21 : vector<8x256xf32>
    %23 = arith.addf %18, %22 : vector<8x256xf32>
    %24 = vector.extract_strided_slice %1 {offsets = [0, 6], sizes = [8, 1], strides = [1, 1]} : vector<8x11xf32> to vector<8x1xf32>
    %25 = vector.broadcast %24 : vector<8x1xf32> to vector<8x256xf32>
    %26 = arith.mulf %23, %25 : vector<8x256xf32>
    %27 = vector.extract_strided_slice %1 {offsets = [0, 7], sizes = [8, 1], strides = [1, 1]} : vector<8x11xf32> to vector<8x1xf32>
    %28 = vector.broadcast %27 : vector<8x1xf32> to vector<8x256xf32>
    %29 = arith.addf %26, %28 : vector<8x256xf32>
    %30 = math.tanh %29 : vector<8x256xf32>
    %31 = vector.extract_strided_slice %1 {offsets = [0, 8], sizes = [8, 1], strides = [1, 1]} : vector<8x11xf32> to vector<8x1xf32>
    %32 = vector.broadcast %31 : vector<8x1xf32> to vector<8x256xf32>
    %33 = arith.mulf %30, %32 : vector<8x256xf32>
    %34 = arith.addf %29, %33 : vector<8x256xf32>
    %35 = vector.extract_strided_slice %1 {offsets = [0, 9], sizes = [8, 1], strides = [1, 1]} : vector<8x11xf32> to vector<8x1xf32>
    %36 = vector.broadcast %35 : vector<8x1xf32> to vector<8x256xf32>
    %37 = arith.mulf %34, %36 : vector<8x256xf32>
    %38 = vector.extract_strided_slice %1 {offsets = [0, 10], sizes = [8, 1], strides = [1, 1]} : vector<8x11xf32> to vector<8x1xf32>
    %39 = vector.broadcast %38 : vector<8x1xf32> to vector<8x256xf32>
    %40 = arith.addf %37, %39 : vector<8x256xf32>
    %41 = arith.negf %40 : vector<8x256xf32>
    %42 = math.exp %41 : vector<8x256xf32>
    %cst = arith.constant 1.000000e+00 : f32
    %43 = vector.broadcast %cst : f32 to vector<8x256xf32>
    %44 = arith.addf %43, %42 : vector<8x256xf32>
    %45 = arith.divf %43, %44 : vector<8x256xf32>
    %c0_3 = arith.constant 0 : index
    %c0_4 = arith.constant 0 : index
    %46 = vector.load %arg4[%c0_3, %c0_4] : memref<8x256xf32, #tpu.memory_space<vmem>>, vector<8x256xf32>
    tpu.vector_store %arg4[%c0_3, %c0_4], %45 {strides = array<i32>} : memref<8x256xf32, #tpu.memory_space<vmem>>, vector<8x256xf32>,
    return
  }
  func.func @transform_0(%arg0: i32, %arg1: i32) -> (i32, i32) {
    %c0_i32 = arith.constant 0 : i32
    return %arg0, %arg1 : i32, i32
  }
  func.func @transform_1(%arg0: i32, %arg1: i32) -> (i32, i32) {
    %c0_i32 = arith.constant 0 : i32
    %c0_i32_0 = arith.constant 0 : i32
    return %arg0, %c0_i32 : i32, i32
  }
  func.func @transform_2(%arg0: i32, %arg1: i32) -> (i32, i32) {
    %c0_i32 = arith.constant 0 : i32
    return %arg0, %arg1 : i32, i32
  }
}

</mosaic_0001>

<llo_original>
// kernel: tpu_custom_call.1
$region0: #{tpu_custom_call.1}
  #allocation0 [shape = 'u32[]', space=smem, size = 0x4, offset = 0x4, fixed_abs, tag = 'smem constant byte address 0x4 - core index']
  #allocation1 [shape = 'u32[72,128]{1,0:T(1,128)}', space=vmem, size = 0x9000, scoped, tag = 'internal scratch']
  %s0 = inlined_call_operand.hbm [shape: f32[8,256], index: 0, kind: input, shape index: {}]
  %s1 = inlined_call_operand.hbm [shape: f32[8,11], index: 1, kind: input, shape index: {}]
  %s2 = inlined_call_operand.hbm [shape: f32[8,256], index: 2, kind: output, shape index: {}]
  %s3 = sld [smem:[#allocation0]]
  $region26: #{tpu_custom_call.1} parent=0
    _
  %s5 = ssub.s32 1, %s3
  %s6 = scalar_select 0, %s5, %s3
  $region1: #{tpu_custom_call.1} parent=0
    #allocation2 [shape = 'u8[8192]{0}', space=vmem, size = 0x2000, scoped, tag = 'input window, operand 0, single buffered']
    #allocation3 [shape = 's32[1]{0}', space=sflag, size = 0x4, scoped, tag = 'scoped memory for tpu_custom_call.1']
    #allocation4 [shape = 's32[1]{0}', space=sflag, size = 0x4, scoped, tag = 'scoped memory for tpu_custom_call.1']
    #allocation5 [shape = 'u8[4096]{0}', space=vmem, size = 0x1000, scoped, tag = 'input window, operand 1, single buffered']
    #allocation6 [shape = 's32[1]{0}', space=sflag, size = 0x4, scoped, tag = 'scoped memory for tpu_custom_call.1']
    #allocation7 [shape = 'u8[8192]{0}', space=vmem, size = 0x2000, scoped, tag = 'output window, operand 0, single buffered']
    %7 = vsyncpa [#allocation3], 0
    %8 = vsyncpa [#allocation6], 0
    %9 = vsyncpa [#allocation4], 0
    // Predicated region
    $region2: #{tpu_custom_call.1} parent=1 // pred_check
      _
    $region3: #{tpu_custom_call.1} parent=1 // pred_check_branch
      %11 = sbr.rel (0) target = $region5
    $region4: #{tpu_custom_call.1} parent=1 // pred_region
      %13 = vsyncadd [#allocation3], 0
      %s15 = sshll.u32 %s0, 4
      %s16 = int_to_ptr.hbm [resolvable:$true] %s15
      %s17 = sshll.u32 [#allocation2], 4
      %s18 = int_to_ptr.vmem [resolvable:$true] %s17
      %20 = dma.hbm_to_vmem [thread:$0]  %s16, 256, %s18, [#allocation3]
    $region5: #{tpu_custom_call.1} parent=1 // pred_fallthru
      _
    // Predicated region
    $region6: #{tpu_custom_call.1} parent=1 // pred_check
      _
    $region7: #{tpu_custom_call.1} parent=1 // pred_check_branch
      %22 = sbr.rel (0) target = $region9
    $region8: #{tpu_custom_call.1} parent=1 // pred_region
      %24 = vsyncadd [#allocation6], 0
      %s26 = sshll.u32 %s1, 4
      %s27 = int_to_ptr.hbm [resolvable:$true] %s26
      %s28 = sshll.u32 [#allocation5], 4
      %s29 = int_to_ptr.vmem [resolvable:$true] %s28
      %31 = dma.hbm_to_vmem [thread:$0]  %s27, 128, %s29, [#allocation6]
    $region9: #{tpu_custom_call.1} parent=1 // pred_fallthru
      _
    // Predicated region
    $region10: #{tpu_custom_call.1} parent=1 // pred_check
      _
    $region11: #{tpu_custom_call.1} parent=1 // pred_check_branch
      %33 = sbr.rel (0) target = $region13
    $region12: #{tpu_custom_call.1} parent=1 // pred_region
      %35 = dma.done [#allocation3], 256
    $region13: #{tpu_custom_call.1} parent=1 // pred_fallthru
      _
    // Predicated region
    $region14: #{tpu_custom_call.1} parent=1 // pred_check
      _
    $region15: #{tpu_custom_call.1} parent=1 // pred_check_branch
      %37 = sbr.rel (0) target = $region17
    $region16: #{tpu_custom_call.1} parent=1 // pred_region
      %39 = dma.done [#allocation6], 128
    $region17: #{tpu_custom_call.1} parent=1 // pred_fallthru
      _
    %v40 = vld [vmem:[#allocation2] sm:$0xff]
    %v41 = vld [vmem:[#allocation2 + $0x8] sm:$0xff]
    %v42 = vld [vmem:[#allocation5] sm:$0xff]
    %44 = vset.pattern.permute.xlu0 0
    %45 = vperm.xlu0 %44, %v42
    %v46 = vpop.permute.xlu0 %45
    %v48 = vmul.f32 %v40, %v46
    %v49 = vmul.f32 %v41, %v46
    %50 = vset.pattern.permute.xlu0 1
    %51 = vperm.xlu0 %50, %v42
    %v52 = vpop.permute.xlu0 %51
    %v54 = vadd.f32 %v48, %v52
    %v55 = vadd.f32 %v49, %v52
    %v56 = vtanh.pop %v54
    %v57 = vtanh.pop %v55
    %58 = vset.pattern.permute.xlu0 2
    %59 = vperm.xlu0 %58, %v42
    %v60 = vpop.permute.xlu0 %59
    %v62 = vmul.f32 %v56, %v60
    %v63 = vmul.f32 %v57, %v60
    %v64 = vadd.f32 %v54, %v62
    %v65 = vadd.f32 %v55, %v63
    %66 = vset.pattern.permute.xlu0 3
    %67 = vperm.xlu0 %66, %v42
    %v68 = vpop.permute.xlu0 %67
    %v70 = vmul.f32 %v64, %v68
    %v71 = vmul.f32 %v65, %v68
    %72 = vset.pattern.permute.xlu0 4
    %73 = vperm.xlu0 %72, %v42
    %v74 = vpop.permute.xlu0 %73
    %v76 = vadd.f32 %v70, %v74
    %v77 = vadd.f32 %v71, %v74
    %v78 = vtanh.pop %v76
    %v79 = vtanh.pop %v77
    %80 = vset.pattern.permute.xlu0 5
    %81 = vperm.xlu0 %80, %v42
    %v82 = vpop.permute.xlu0 %81
    %v84 = vmul.f32 %v78, %v82
    %v85 = vmul.f32 %v79, %v82
    %v86 = vadd.f32 %v76, %v84
    %v87 = vadd.f32 %v77, %v85
    %88 = vset.pattern.permute.xlu0 6
    %89 = vperm.xlu0 %88, %v42
    %v90 = vpop.permute.xlu0 %89
    %v92 = vmul.f32 %v86, %v90
    %v93 = vmul.f32 %v87, %v90
    %94 = vset.pattern.permute.xlu0 7
    %95 = vperm.xlu0 %94, %v42
    %v96 = vpop.permute.xlu0 %95
    %v98 = vadd.f32 %v92, %v96
    %v99 = vadd.f32 %v93, %v96
    %v100 = vtanh.pop %v98
    %v101 = vtanh.pop %v99
    %102 = vset.pattern.permute.xlu0 8
    %103 = vperm.xlu0 %102, %v42
    %v104 = vpop.permute.xlu0 %103
    %v106 = vmul.f32 %v100, %v104
    %v107 = vmul.f32 %v101, %v104
    %v108 = vadd.f32 %v98, %v106
    %v109 = vadd.f32 %v99, %v107
    %110 = vset.pattern.permute.xlu0 9
    %111 = vperm.xlu0 %110, %v42
    %v112 = vpop.permute.xlu0 %111
    %v114 = vmul.f32 %v108, %v112
    %v115 = vmul.f32 %v109, %v112
    %116 = vset.pattern.permute.xlu0 10
    %117 = vperm.xlu0 %116, %v42
    %v118 = vpop.permute.xlu0 %117
    %v120 = vadd.f32 %v114, %v118
    %v121 = vadd.f32 %v115, %v118
    %v122 = vxor.u32 %v120, 2147483648
    %v123 = vxor.u32 %v121, 2147483648
    %v124 = vmul.f32 %v122, 1.442695
    %v125 = vpow.pop %v124
    %v126 = vmul.f32 %v123, 1.442695
    %v127 = vpow.pop %v126
    %v128 = vadd.f32 %v125, 1.0
    %v129 = vadd.f32 %v127, 1.0
    %v130 = vrcp.pop %v128
    %v131 = vmul.f32 %v128, %v130
    %v132 = vsub.f32 1.0, %v131
    %v133 = vmul.f32 %v130, %v132
    %v134 = vadd.f32 %v130, %v133
    %vm135 = vweird.f32 %v128
    %vm136 = vweird.f32 %v130
    %vm137 = vmor %vm135, %vm136
    %v138 = vsel %vm137, %v130, %v134
    %v139 = vand.u32 2147483647, %v128
    %vm140 = vcmp.eq.f32.partialorder %v139, 8.507059e+37
    %v141 = vand.u32 %v128, 2147483648
    %v142 = vor.u32 1.1754944e-38, %v141
    %v143 = vsel %vm140, %v142, %v138
    %v144 = vmul.f32 1.0, %v143
    %v145 = vrcp.pop %v129
    %v146 = vmul.f32 %v129, %v145
    %v147 = vsub.f32 1.0, %v146
    %v148 = vmul.f32 %v145, %v147
    %v149 = vadd.f32 %v145, %v148
    %vm150 = vweird.f32 %v129
    %vm151 = vweird.f32 %v145
    %vm152 = vmor %vm150, %vm151
    %v153 = vsel %vm152, %v145, %v149
    %v154 = vand.u32 2147483647, %v129
    %vm155 = vcmp.eq.f32.partialorder %v154, 8.507059e+37
    %v156 = vand.u32 %v129, 2147483648
    %v157 = vor.u32 1.1754944e-38, %v156
    %v158 = vsel %vm155, %v157, %v153
    %v159 = vmul.f32 1.0, %v158
    %160 = vst [vmem:[#allocation7] sm:$0xff] %v144
    %161 = vst [vmem:[#allocation7 + $0x8] sm:$0xff] %v159
    // Predicated region
    $region18: #{tpu_custom_call.1} parent=1 // pred_check
      _
    $region19: #{tpu_custom_call.1} parent=1 // pred_check_branch
      %163 = sbr.rel (0) target = $region21
    $region20: #{tpu_custom_call.1} parent=1 // pred_region
      %165 = vsyncadd [#allocation4], 0
      %s167 = sshll.u32 [#allocation7], 4
      %s168 = int_to_ptr.vmem [resolvable:$true] %s167
      %s169 = sshll.u32 %s2, 4
      %s170 = int_to_ptr.hbm [resolvable:$true] %s169
      %172 = dma.vmem_to_hbm [thread:$0]  %s168, 256, %s170, [#allocation4]
    $region21: #{tpu_custom_call.1} parent=1 // pred_fallthru
      _
    // Predicated region
    $region22: #{tpu_custom_call.1} parent=1 // pred_check
      _
    $region23: #{tpu_custom_call.1} parent=1 // pred_check_branch
      %174 = sbr.rel (0) target = $region25
    $region24: #{tpu_custom_call.1} parent=1 // pred_region
      %176 = dma.done [#allocation4], 256
    $region25: #{tpu_custom_call.1} parent=1 // pred_fallthru
      _
    %177 = vsyncpa [#allocation3], 1
    %178 = vsyncpa [#allocation6], 1
    %179 = vsyncpa [#allocation4], 1

</llo_original>
